<compile_context>
chip_gen: v6e
topology: v6e:2x2x1
jax: 0.10.0
libtpu: 0.0.40
codegen_flags: <defaults>
</compile_context>

<pallas_src>
import functools

import jax
import jax.numpy as jnp
from jax.experimental import pallas as pl
from jax.experimental.pallas import tpu as pltpu


# Row tiles per kernel (perf review): big tiles amortize ~0.35us/step grid
# overhead, fill the MXU rows, and reach the HBM roofline on the mem-bound
# kernels.  Wrappers clamp to the actual row count so toy shapes still work.
_LN_ROW_BLOCK = 512
_FFN_ROW_BLOCK = 256
_CLS_ROW_BLOCK = 256
_CLS_V_BLOCK = 512                      # vocab tile for the CE online logsumexp
_VMEM_LIMIT = 64 * 1024 * 1024          # v5e/v6e: 128 MiB physical; v7x: 64 MiB


def _round_up(x, m):
    return (x + m - 1) // m * m


def _pick_tile(m, block):
    return m if m <= block else block


def _pad_rows(x, tm, fill=0):
    pad = (-x.shape[0]) % tm
    if pad:
        x = jnp.pad(x, ((0, pad),) + ((0, 0),) * (x.ndim - 1), constant_values=fill)
    return x


# ------------------------------ LayerNorm core -------------------------------

def _ln_core(x, g, b, eps):
    mu = jnp.mean(x, axis=-1, keepdims=True)
    var = jnp.mean((x - mu) ** 2, axis=-1, keepdims=True)
    return (x - mu) * jax.lax.rsqrt(var + eps) * g + b


def _ln_kernel(x_ref, g_ref, b_ref, o_ref, *, eps):
    o_ref[...] = _ln_core(x_ref[...].astype(jnp.float32),
                          g_ref[...], b_ref[...], eps).astype(o_ref.dtype)


def layer_norm(x, g, b, eps=1e-12):
    """Standalone LayerNorm (only used once, for the embedding LN)."""
    M, H = x.shape
    tm = _pick_tile(M, _LN_ROW_BLOCK)
    xp = _pad_rows(x, tm)
    Mp = xp.shape[0]
    out = pl.pallas_call(
        functools.partial(_ln_kernel, eps=eps),
        out_shape=jax.ShapeDtypeStruct((Mp, H), jnp.float32),
        grid=(Mp // tm,),
        in_specs=[pl.BlockSpec((tm, H), lambda i: (i, 0)),
                  pl.BlockSpec((1, H), lambda i: (0, 0)),
                  pl.BlockSpec((1, H), lambda i: (0, 0))],
        out_specs=pl.BlockSpec((tm, H), lambda i: (i, 0)),
        compiler_params=pltpu.CompilerParams(dimension_semantics=("parallel",)),
    )(xp, g.reshape(1, H), b.reshape(1, H))
    return out[:M]


# -------------- fused attention block (QKV + softmax + out-proj + LN) --------

def _attn_kernel(x_ref, qkvw_ref, qkvb_ref, ow_ref, ob_ref, m_ref,
                 g_ref, b_ref, o_ref, acc_ref, *, scale, eps):
    hd = pl.program_id(1)

    @pl.when(hd == 0)
    def _():
        acc_ref[...] = jnp.zeros_like(acc_ref)

    x = x_ref[0]                                    # (S, H) f32 (also the residual)
    xb = x.astype(jnp.bfloat16)

    # Head-major weights arrive as their own (H, dh) blocks via BlockSpec DMA:
    # three clean per-head matmuls, no in-kernel lane slicing of a fused (S, 3H).
    w = qkvw_ref[0]                                 # (3, H, dh) bf16
    bqkv = qkvb_ref[0]                              # (3, 1, dh) f32
    q = jnp.dot(xb, w[0], preferred_element_type=jnp.float32) + bqkv[0]
    k = jnp.dot(xb, w[1], preferred_element_type=jnp.float32) + bqkv[1]
    v = jnp.dot(xb, w[2], preferred_element_type=jnp.float32) + bqkv[2]

    s = jax.lax.dot_general(q.astype(jnp.bfloat16), k.astype(jnp.bfloat16),
                            (((1,), (1,)), ((), ())),
                            preferred_element_type=jnp.float32) * scale
    s = s + m_ref[0]                                # (1, S) additive key mask
    mmax = jnp.max(s, axis=-1, keepdims=True)
    e = jnp.exp(s - mmax)
    p = e * pl.reciprocal(jnp.sum(e, axis=-1, keepdims=True), approx=True)
    ctx = jnp.dot(p.astype(jnp.bfloat16), v.astype(jnp.bfloat16),
                  preferred_element_type=jnp.float32)          # (S, dh)
    acc_ref[...] += jnp.dot(ctx.astype(jnp.bfloat16), ow_ref[0],
                            preferred_element_type=jnp.float32)  # (S, H)

    @pl.when(hd == pl.num_programs(1) - 1)
    def _():
        # fused BertSelfOutput: out-proj bias + residual + LayerNorm epilogue.
        y = acc_ref[...] + ob_ref[...] + x
        o_ref[0] = _ln_core(y, g_ref[...], b_ref[...], eps).astype(o_ref.dtype)


def attention_block(h, qkv_w, qkv_b, o_w, o_b, ln_g, ln_b, add_mask, nh, dh,
                    eps=1e-12):
    B, S, H = h.shape
    scale = 1.0 / (dh ** 0.5)
    return pl.pallas_call(
        functools.partial(_attn_kernel, scale=scale, eps=eps),
        out_shape=jax.ShapeDtypeStruct((B, S, H), jnp.float32),
        grid=(B, nh),
        in_specs=[
            pl.BlockSpec((1, S, H), lambda b, hd: (b, 0, 0)),
            pl.BlockSpec((1, 3, H, dh), lambda b, hd: (hd, 0, 0, 0)),
            pl.BlockSpec((1, 3, 1, dh), lambda b, hd: (hd, 0, 0, 0)),
            pl.BlockSpec((1, dh, H), lambda b, hd: (hd, 0, 0)),
            pl.BlockSpec((1, H), lambda b, hd: (0, 0)),
            pl.BlockSpec((1, 1, S), lambda b, hd: (b, 0, 0)),
            pl.BlockSpec((1, H), lambda b, hd: (0, 0)),
            pl.BlockSpec((1, H), lambda b, hd: (0, 0)),
        ],
        out_specs=pl.BlockSpec((1, S, H), lambda b, hd: (b, 0, 0)),
        scratch_shapes=[pltpu.VMEM((S, H), jnp.float32)],
        compiler_params=pltpu.CompilerParams(
            dimension_semantics=("parallel", "arbitrary"),
            vmem_limit_bytes=_VMEM_LIMIT),
    )(h, qkv_w, qkv_b, o_w, o_b.reshape(1, H), add_mask,
      ln_g.reshape(1, H), ln_b.reshape(1, H))


# ---------------- fused FFN (dense + GELU + dense + residual + LN) -----------

def _ffn_kernel(x_ref, w1_ref, b1_ref, w2_ref, b2_ref, g_ref, b_ref, o_ref, *, eps):
    x = x_ref[...]                                  # (tm, H) f32 (residual)
    h1 = jnp.dot(x.astype(jnp.bfloat16), w1_ref[...],
                 preferred_element_type=jnp.float32) + b1_ref[...]
    # TODO(synk): HF BERT uses exact (erf) GELU; tanh approximation used here.
    g1 = 0.5 * h1 * (1.0 + jnp.tanh(0.7978845608028654 * (h1 + 0.044715 * h1 * h1 * h1)))
    out = jnp.dot(g1.astype(jnp.bfloat16), w2_ref[...],
                  preferred_element_type=jnp.float32) + b2_ref[...]
    # fused BertOutput: residual add + LayerNorm epilogue.
    o_ref[...] = _ln_core(out + x, g_ref[...], b_ref[...], eps).astype(o_ref.dtype)


def ffn(x, w1, b1, w2, b2, ln_g, ln_b, eps=1e-12):
    M, H = x.shape
    I = w1.shape[1]
    tm = _pick_tile(M, _FFN_ROW_BLOCK)
    xp = _pad_rows(x, tm)
    Mp = xp.shape[0]
    out = pl.pallas_call(
        functools.partial(_ffn_kernel, eps=eps),
        out_shape=jax.ShapeDtypeStruct((Mp, H), jnp.float32),
        grid=(Mp // tm,),
        in_specs=[pl.BlockSpec((tm, H), lambda i: (i, 0)),
                  pl.BlockSpec((H, I), lambda i: (0, 0)),
                  pl.BlockSpec((1, I), lambda i: (0, 0)),
                  pl.BlockSpec((I, H), lambda i: (0, 0)),
                  pl.BlockSpec((1, H), lambda i: (0, 0)),
                  pl.BlockSpec((1, H), lambda i: (0, 0)),
                  pl.BlockSpec((1, H), lambda i: (0, 0))],
        out_specs=pl.BlockSpec((tm, H), lambda i: (i, 0)),
        compiler_params=pltpu.CompilerParams(
            dimension_semantics=("parallel",),
            vmem_limit_bytes=_VMEM_LIMIT),
    )(xp, w1, b1.reshape(1, I), w2, b2.reshape(1, H),
      ln_g.reshape(1, H), ln_b.reshape(1, H))
    return out[:M]


# ---------------------- fused classifier + softmax / CE ----------------------

def _cls_softmax_kernel(x_ref, w_ref, b_ref, o_ref):
    logits = jnp.dot(x_ref[...].astype(jnp.bfloat16), w_ref[...],
                     preferred_element_type=jnp.float32) + b_ref[...]
    m = jnp.max(logits, axis=-1, keepdims=True)
    e = jnp.exp(logits - m)
    inv = 1.0 / jnp.sum(e, axis=-1, keepdims=True)   # one divide per row + bcast mul
    o_ref[...] = e * inv


def classifier_softmax(x, w_pad, b_pad, vocab):
    # TODO(synk): at real (20k+) vocab on v7x, tile the vocab axis with a
    # flash-style online softmax instead of keeping the whole (H, Vp) resident.
    M, H = x.shape
    Vp = w_pad.shape[1]
    tm = _pick_tile(M, _CLS_ROW_BLOCK)
    xp = _pad_rows(x, tm)
    Mp = xp.shape[0]
    probs = pl.pallas_call(
        _cls_softmax_kernel,
        out_shape=jax.ShapeDtypeStruct((Mp, Vp), jnp.float32),
        grid=(Mp // tm,),
        in_specs=[pl.BlockSpec((tm, H), lambda i: (i, 0)),
                  pl.BlockSpec((H, Vp), lambda i: (0, 0)),
                  pl.BlockSpec((1, Vp), lambda i: (0, 0))],
        out_specs=pl.BlockSpec((tm, Vp), lambda i: (i, 0)),
        compiler_params=pltpu.CompilerParams(
            dimension_semantics=("parallel",),
            vmem_limit_bytes=_VMEM_LIMIT),
    )(xp, w_pad, b_pad.reshape(1, Vp))
    return probs[:M, :vocab]


def _cls_ce_kernel(x_ref, w_ref, b_ref, y_ref, loss_ref,
                   m_sc, l_sc, t_sc, acc_ref, *, tv):
    i = pl.program_id(0)
    j = pl.program_id(1)
    nj = pl.num_programs(1)

    @pl.when((i == 0) & (j == 0))
    def _():
        acc_ref[0] = jnp.float32(0.0)
        acc_ref[1] = jnp.float32(0.0)

    @pl.when(j == 0)
    def _():
        m_sc[...] = jnp.full_like(m_sc, -3.0e38)
        l_sc[...] = jnp.zeros_like(l_sc)
        t_sc[...] = jnp.zeros_like(t_sc)

    # vocab-tiled logits + online logsumexp (weight tile streamed, never fully
    # resident -> fits v7x 64 MiB VMEM at real vocab sizes).
    logits = jnp.dot(x_ref[...].astype(jnp.bfloat16), w_ref[...],
                     preferred_element_type=jnp.float32) + b_ref[...]   # (tm, tv)
    y = y_ref[...]                                                      # (tm, 1)
    col = j * tv + jax.lax.broadcasted_iota(jnp.int32, logits.shape, 1)
    t_sc[...] += jnp.sum(jnp.where(col == y, logits, 0.0), axis=-1, keepdims=True)

    m_new = jnp.maximum(m_sc[...], jnp.max(logits, axis=-1, keepdims=True))
    l_sc[...] = (l_sc[...] * jnp.exp(m_sc[...] - m_new)
                 + jnp.sum(jnp.exp(logits - m_new), axis=-1, keepdims=True))
    m_sc[...] = m_new

    @pl.when(j == nj - 1)
    def _():
        lse = jnp.log(l_sc[...]) + m_sc[...]
        valid = (y != -1).astype(jnp.float32)          # ignore_index = -1
        acc_ref[0] = acc_ref[0] + jnp.sum((lse - t_sc[...]) * valid)
        acc_ref[1] = acc_ref[1] + jnp.sum(valid)

    @pl.when((i == pl.num_programs(0) - 1) & (j == nj - 1))
    def _():
        loss_ref[0, 0] = acc_ref[0] / jnp.maximum(acc_ref[1], 1.0)


def classifier_ce(x, w_pad, b_pad, labels):
    M, H = x.shape
    Vp = w_pad.shape[1]
    tv = min(_CLS_V_BLOCK, Vp)
    assert Vp % tv == 0
    tm = _pick_tile(M, _CLS_ROW_BLOCK)
    xp = _pad_rows(x, tm)
    yp = _pad_rows(labels.reshape(M, 1).astype(jnp.int32), tm, fill=-1)
    Mp = xp.shape[0]
    loss = pl.pallas_call(
        functools.partial(_cls_ce_kernel, tv=tv),
        out_shape=jax.ShapeDtypeStruct((1, 1), jnp.float32),
        grid=(Mp // tm, Vp // tv),
        in_specs=[pl.BlockSpec((tm, H), lambda i, j: (i, 0)),
                  pl.BlockSpec((H, tv), lambda i, j: (0, j)),
                  pl.BlockSpec((1, tv), lambda i, j: (0, j)),
                  pl.BlockSpec((tm, 1), lambda i, j: (i, 0))],
        out_specs=pl.BlockSpec(memory_space=pltpu.MemorySpace.SMEM),
        scratch_shapes=[pltpu.VMEM((tm, 1), jnp.float32),
                        pltpu.VMEM((tm, 1), jnp.float32),
                        pltpu.VMEM((tm, 1), jnp.float32),
                        pltpu.SMEM((2,), jnp.float32)],
        compiler_params=pltpu.CompilerParams(
            dimension_semantics=("arbitrary", "arbitrary"),
            vmem_limit_bytes=_VMEM_LIMIT),
    )(xp, w_pad, b_pad.reshape(1, Vp), yp)
    return loss[0, 0]


# -------------------------- parameters / model glue --------------------------

def init_params(key, vocab_size, hidden_size, num_layers, num_heads,
                intermediate_size, max_position=64, type_vocab_size=2):
    H = hidden_size
    dh = H // num_heads

    def nrm(k, shape):
        return 0.02 * jax.random.normal(k, shape, dtype=jnp.float32)

    keys = jax.random.split(key, 4 + num_layers)
    p = {
        "word_emb": nrm(keys[0], (vocab_size, H)),
        "pos_emb": nrm(keys[1], (max_position, H)),
        "type_emb": nrm(keys[2], (type_vocab_size, H)),
        "emb_ln_g": jnp.ones((H,), jnp.float32),
        "emb_ln_b": jnp.zeros((H,), jnp.float32),
        "layers": [],
        "num_heads": num_heads,
        "vocab_size": vocab_size,
    }
    for li in range(num_layers):
        lk = jax.random.split(keys[4 + li], 6)
        q_w = nrm(lk[0], (H, H)); k_w = nrm(lk[1], (H, H)); v_w = nrm(lk[2], (H, H))
        # head-major bf16 layouts (cast ONCE here, never in-kernel):
        #   qkv_w[h, 0/1/2] = W{q,k,v}[:, h*dh:(h+1)*dh]     -> (nh, 3, H, dh)
        #   o_w[h]          = W_o[h*dh:(h+1)*dh, :]          -> (nh, dh, H)
        qkv_w = jnp.stack([w.reshape(H, num_heads, dh).transpose(1, 0, 2)
                           for w in (q_w, k_w, v_w)], axis=1).astype(jnp.bfloat16)
        o_w = nrm(lk[3], (H, H)).reshape(num_heads, dh, H).astype(jnp.bfloat16)
        p["layers"].append({
            "qkv_w": qkv_w,
            "qkv_b": jnp.zeros((num_heads, 3, 1, dh), jnp.float32),
            "o_w": o_w,
            "o_b": jnp.zeros((H,), jnp.float32),
            "ln1_g": jnp.ones((H,), jnp.float32),
            "ln1_b": jnp.zeros((H,), jnp.float32),
            "i_w": nrm(lk[4], (H, intermediate_size)).astype(jnp.bfloat16),
            "i_b": jnp.zeros((intermediate_size,), jnp.float32),
            "f_w": nrm(lk[5], (intermediate_size, H)).astype(jnp.bfloat16),
            "f_b": jnp.zeros((H,), jnp.float32),
            "ln2_g": jnp.ones((H,), jnp.float32),
            "ln2_b": jnp.zeros((H,), jnp.float32),
        })
    # classifier padded lane-dense; padded columns: weight 0, bias -1e30 so their
    # softmax prob / logsumexp contribution is 0 (bias kept f32 -- do not lower).
    ck = jax.random.split(keys[3], 2)
    V = vocab_size
    Vp = _round_up(V, 128) if V <= _CLS_V_BLOCK else _round_up(V, _CLS_V_BLOCK)
    cls_w = nrm(ck[0], (H, V))
    p["cls_w"] = jnp.pad(cls_w, ((0, 0), (0, Vp - V))).astype(jnp.bfloat16)
    p["cls_b"] = jnp.concatenate([jnp.zeros((V,), jnp.float32),
                                  jnp.full((Vp - V,), -1e30, jnp.float32)])
    return p


def bert_encoder(params, x_ids, attn_mask):
    B, S = x_ids.shape
    H = params["word_emb"].shape[1]
    nh = params["num_heads"]
    dh = H // nh
    # embeddings (data-dependent gather is glue in plain JAX)
    emb = (jnp.take(params["word_emb"], x_ids, axis=0)
           + params["pos_emb"][:S][None, :, :]
           + params["type_emb"][0][None, None, :])
    h = layer_norm(emb.reshape(B * S, H), params["emb_ln_g"], params["emb_ln_b"])
    # BERT-style additive attention mask over keys: (1 - mask) * -10000, (B, 1, S)
    add_mask = ((1.0 - attn_mask.astype(jnp.float32)) * -10000.0)[:, None, :]
    for layer in params["layers"]:
        h = attention_block(h.reshape(B, S, H), layer["qkv_w"], layer["qkv_b"],
                            layer["o_w"], layer["o_b"], layer["ln1_g"], layer["ln1_b"],
                            add_mask, nh, dh)
        h = ffn(h.reshape(B * S, H), layer["i_w"], layer["i_b"],
                layer["f_w"], layer["f_b"], layer["ln2_g"], layer["ln2_b"])
    return h   # (B*S, H)


def sft_forward(params, x, mask=None, y=None):
    """Mirrors SFT.forward: with y -> CE loss (ignore_index=-1); else softmax probs."""
    B, S = x.shape
    V = params["vocab_size"]
    if y is not None:
        m = mask if mask is not None else jnp.ones((B, S), jnp.float32)
        h = bert_encoder(params, x, m)
        return classifier_ce(h, params["cls_w"], params["cls_b"], y.reshape(-1))
    else:
        h = bert_encoder(params, x, jnp.ones((B, S), jnp.float32))
        probs = classifier_softmax(h, params["cls_w"], params["cls_b"], V)
        return probs.reshape(B, S, V)


# ----------------------------------- main -----------------------------------

if __name__ == "__main__":
    vocab_size, hidden_size = 30, 32
    num_layers, num_heads, intermediate = 2, 2, 64
    B, S = 2, 8

    key = jax.random.PRNGKey(0)
    pkey, xkey, ykey = jax.random.split(key, 3)
    params = init_params(pkey, vocab_size, hidden_size, num_layers, num_heads,
                         intermediate, max_position=64)

    x = jax.random.randint(xkey, (B, S), 0, vocab_size, dtype=jnp.int32)
    mask = jnp.ones((B, S), jnp.float32).at[1, 6:].set(0.0)
    y = jax.random.randint(ykey, (B, S), 0, vocab_size, dtype=jnp.int32)
    y = y.at[1, 6:].set(-1)  # exercise ignore_index=-1

    # inference branch: softmax probabilities over vocab
    probs = jax.block_until_ready(sft_forward(params, x))
    # training branch: cross-entropy loss
    loss = jax.block_until_ready(sft_forward(params, x, mask=mask, y=y))

    assert probs.shape == (B, S, vocab_size)
    assert bool(jnp.all(jnp.isfinite(probs))) and bool(jnp.isfinite(loss))
    assert bool(jnp.allclose(jnp.sum(probs, axis=-1), 1.0, atol=1e-4))
    print("KERNEL_OK")
</pallas_src>

<mosaic_0001>
module attributes {stable_mosaic.version = 11 : i64} {
  func.func @_ln_kernel(%arg0: i32, %arg1: memref<16x32xf32, #tpu.memory_space<vmem>>, %arg2: memref<1x32xf32, #tpu.memory_space<vmem>>, %arg3: memref<1x32xf32, #tpu.memory_space<vmem>>, %arg4: memref<16x32xf32, #tpu.memory_space<vmem>>) attributes {dimension_semantics = [#tpu.dimension_semantics<parallel>], iteration_bounds = array<i64: 1>, scalar_prefetch = 0 : i64, scratch_operands = 0 : i64, tpu.core_type = #tpu.core_type<tc>, window_params = [{transform_indices = @transform_0, window_bounds = array<i64: 16, 32>}, {pipeline_mode = #tpu.pipeline_mode<synchronous>, transform_indices = @transform_1, window_bounds = array<i64: 1, 32>}, {pipeline_mode = #tpu.pipeline_mode<synchronous>, transform_indices = @transform_2, window_bounds = array<i64: 1, 32>}, {transform_indices = @transform_3, window_bounds = array<i64: 16, 32>}]} {
    %c0 = arith.constant 0 : index
    %c0_0 = arith.constant 0 : index
    %0 = vector.load %arg1[%c0, %c0_0] : memref<16x32xf32, #tpu.memory_space<vmem>>, vector<16x32xf32>
    %c0_1 = arith.constant 0 : index
    %c0_2 = arith.constant 0 : index
    %1 = vector.load %arg2[%c0_1, %c0_2] : memref<1x32xf32, #tpu.memory_space<vmem>>, vector<1x32xf32>
    %c0_3 = arith.constant 0 : index
    %c0_4 = arith.constant 0 : index
    %2 = vector.load %arg3[%c0_3, %c0_4] : memref<1x32xf32, #tpu.memory_space<vmem>>, vector<1x32xf32>
    %cst = arith.constant dense<0.000000e+00> : vector<16xf32>
    %3 = vector.multi_reduction <add>, %0, %cst [1] : vector<16x32xf32> to vector<16xf32>
    %4 = vector.shape_cast %3 : vector<16xf32> to vector<16x1xf32>
    %cst_5 = arith.constant 3.200000e+01 : f32
    %5 = vector.broadcast %cst_5 : f32 to vector<16x1xf32>
    %6 = arith.divf %4, %5 : vector<16x1xf32>
    %7 = vector.broadcast %6 : vector<16x1xf32> to vector<16x32xf32>
    %8 = arith.subf %0, %7 : vector<16x32xf32>
    %9 = arith.mulf %8, %8 : vector<16x32xf32>
    %cst_6 = arith.constant dense<0.000000e+00> : vector<16xf32>
    %10 = vector.multi_reduction <add>, %9, %cst_6 [1] : vector<16x32xf32> to vector<16xf32>
    %11 = vector.shape_cast %10 : vector<16xf32> to vector<16x1xf32>
    %cst_7 = arith.constant 3.200000e+01 : f32
    %12 = vector.broadcast %cst_7 : f32 to vector<16x1xf32>
    %13 = arith.divf %11, %12 : vector<16x1xf32>
    %14 = vector.broadcast %6 : vector<16x1xf32> to vector<16x32xf32>
    %15 = arith.subf %0, %14 : vector<16x32xf32>
    %cst_8 = arith.constant 9.99999996E-13 : f32
    %16 = vector.broadcast %cst_8 : f32 to vector<16x1xf32>
    %17 = arith.addf %13, %16 : vector<16x1xf32>
    %18 = math.rsqrt %17 : vector<16x1xf32>
    %19 = vector.broadcast %18 : vector<16x1xf32> to vector<16x32xf32>
    %20 = arith.mulf %15, %19 : vector<16x32xf32>
    %21 = vector.broadcast %1 : vector<1x32xf32> to vector<16x32xf32>
    %22 = arith.mulf %20, %21 : vector<16x32xf32>
    %23 = vector.broadcast %2 : vector<1x32xf32> to vector<16x32xf32>
    %24 = arith.addf %22, %23 : vector<16x32xf32>
    %c0_9 = arith.constant 0 : index
    %c0_10 = arith.constant 0 : index
    %25 = vector.load %arg4[%c0_9, %c0_10] : memref<16x32xf32, #tpu.memory_space<vmem>>, vector<16x32xf32>
    tpu.vector_store %arg4[%c0_9, %c0_10], %24 {strides = array<i32>} : memref<16x32xf32, #tpu.memory_space<vmem>>, vector<16x32xf32>,
    return
  }
  func.func @transform_0(%arg0: i32) -> (i32, i32) {
    %c0_i32 = arith.constant 0 : i32
    %c0_i32_0 = arith.constant 0 : i32
    return %arg0, %c0_i32 : i32, i32
  }
  func.func @transform_1(%arg0: i32) -> (i32, i32) {
    %c0_i32 = arith.constant 0 : i32
    %c0_i32_0 = arith.constant 0 : i32
    %c0_i32_1 = arith.constant 0 : i32
    return %c0_i32, %c0_i32_0 : i32, i32
  }
  func.func @transform_2(%arg0: i32) -> (i32, i32) {
    %c0_i32 = arith.constant 0 : i32
    %c0_i32_0 = arith.constant 0 : i32
    %c0_i32_1 = arith.constant 0 : i32
    return %c0_i32, %c0_i32_0 : i32, i32
  }
  func.func @transform_3(%arg0: i32) -> (i32, i32) {
    %c0_i32 = arith.constant 0 : i32
    %c0_i32_0 = arith.constant 0 : i32
    return %arg0, %c0_i32 : i32, i32
  }
}

</mosaic_0001>

<llo_original>
// kernel: tpu_custom_call.1
$region0: #{tpu_custom_call.1}
  #allocation0 [shape = 'u32[]', space=smem, size = 0x4, offset = 0x4, fixed_abs, tag = 'smem constant byte address 0x4 - core index']
  #allocation1 [shape = 'u32[144,128]{1,0:T(1,128)}', space=vmem, size = 0x12000, scoped, tag = 'internal scratch']
  %s0 = inlined_call_operand.hbm [shape: f32[16,32], index: 0, kind: input, shape index: {}]
  %s1 = inlined_call_operand.vmem [shape: f32[1,32], index: 1, kind: input, shape index: {}]
  %s2 = inlined_call_operand.vmem [shape: f32[1,32], index: 2, kind: input, shape index: {}]
  %s3 = inlined_call_operand.hbm [shape: f32[16,32], index: 3, kind: output, shape index: {}]
  %s4 = sld [smem:[#allocation0]]
  $region26: #{tpu_custom_call.1} parent=0
    _
  %s6 = ssub.s32 1, %s4
  %s7 = scalar_select 0, %s6, %s4
  $region1: #{tpu_custom_call.1} parent=0
    #allocation2 [shape = 'u8[8192]{0}', space=vmem, size = 0x2000, scoped, tag = 'input window, operand 0, single buffered']
    #allocation3 [shape = 's32[1]{0}', space=sflag, size = 0x4, scoped, tag = 'scoped memory for tpu_custom_call.1']
    #allocation4 [shape = 's32[1]{0}', space=sflag, size = 0x4, scoped, tag = 'scoped memory for tpu_custom_call.1']
    #allocation5 [shape = 'u8[8192]{0}', space=vmem, size = 0x2000, scoped, tag = 'output window, operand 0, single buffered']
    %8 = vsyncpa [#allocation3], 0
    %9 = vsyncpa [#allocation4], 0
    // Predicated region
    $region2: #{tpu_custom_call.1} parent=1 // pred_check
      _
    $region3: #{tpu_custom_call.1} parent=1 // pred_check_branch
      %11 = sbr.rel (0) target = $region5
    $region4: #{tpu_custom_call.1} parent=1 // pred_region
      %s13 = ssub.s32 256, 256
      %14 = vsyncadd [#allocation3], %s13
      %s15 = sshll.u32 [#allocation2], 4
      %s16 = int_to_ptr.vmem [resolvable:$true] %s15
      %21 = dma.hbm_to_vmem [thread:$0]  %s0, 256, %s16, [#allocation3], 128, 128, 8
    $region5: #{tpu_custom_call.1} parent=1 // pred_fallthru
      _
    // Predicated region
    $region6: #{tpu_custom_call.1} parent=1 // pred_check
      _
    $region7: #{tpu_custom_call.1} parent=1 // pred_check_branch
      %23 = sbr.rel (0) target = $region9
    $region8: #{tpu_custom_call.1} parent=1 // pred_region
      _
    $region9: #{tpu_custom_call.1} parent=1 // pred_fallthru
      _
    // Predicated region
    $region10: #{tpu_custom_call.1} parent=1 // pred_check
      _
    $region11: #{tpu_custom_call.1} parent=1 // pred_check_branch
      %25 = sbr.rel (0) target = $region13
    $region12: #{tpu_custom_call.1} parent=1 // pred_region
      _
    $region13: #{tpu_custom_call.1} parent=1 // pred_fallthru
      _
    // Predicated region
    $region14: #{tpu_custom_call.1} parent=1 // pred_check
      _
    $region15: #{tpu_custom_call.1} parent=1 // pred_check_branch
      %27 = sbr.rel (0) target = $region17
    $region16: #{tpu_custom_call.1} parent=1 // pred_region
      %28 = dma.done [#allocation3], 256
    $region17: #{tpu_custom_call.1} parent=1 // pred_fallthru
      _
    %v29 = vld [vmem:[#allocation2] sm:$0xff]
    %v30 = vld [vmem:[#allocation2 + $0x8] sm:$0xff]
    %v31 = vld [vmem:[%s1] sm:$0x1]
    %v32 = vld [vmem:[%s2] sm:$0x1]
    %vm33 = vcmask 261120
    %v34 = vsel %vm33, %v29, 0.0
    %35 = vadd.xlane.f32.xlu0 %v34
    %v36 = vpop.xlane.xlu0 %35
    %v37 = vsel %vm33, %v30, 0.0
    %38 = vadd.xlane.f32.xlu0 %v37
    %v39 = vpop.xlane.xlu0 %38
    %v40 = vrcp.pop 32.0
    %v41 = vmul.f32 %v36, %v40
    %v42 = vmul.f32 %v39, %v40
    %v43 = vsub.f32 %v29, %v41
    %v44 = vsub.f32 %v30, %v42
    %v45 = vmul.f32 %v43, %v43
    %v46 = vmul.f32 %v44, %v44
    %v47 = vsel %vm33, %v45, 0.0
    %48 = vadd.xlane.f32.xlu0 %v47
    %v49 = vpop.xlane.xlu0 %48
    %v50 = vsel %vm33, %v46, 0.0
    %51 = vadd.xlane.f32.xlu0 %v50
    %v52 = vpop.xlane.xlu0 %51
    %v53 = vmul.f32 %v49, %v40
    %v54 = vmul.f32 %v52, %v40
    %v55 = vadd.f32 %v53, 1e-12
    %v56 = vadd.f32 %v54, 1e-12
    %v57 = vrsqrt.pop %v55
    %v58 = vrsqrt.pop %v56
    %v59 = vmul.f32 %v43, %v57
    %v60 = vmul.f32 %v44, %v58
    %v62 = vlaneseq
    %v63 = vshrl.u32 %v62, 7
    %v64 = vsub.s32 0, %v63
    %v65 = vrot.slane %v31, %v64
    %v67 = vmul.f32 %v59, %v65
    %v68 = vmul.f32 %v60, %v65
    %v70 = vlaneseq
    %v71 = vshrl.u32 %v70, 7
    %v72 = vsub.s32 0, %v71
    %v73 = vrot.slane %v32, %v72
    %v75 = vadd.f32 %v67, %v73
    %v76 = vadd.f32 %v68, %v73
    %77 = vst.msk [vmem:[#allocation5] sm:$0xff] %vm33, %v75
    %78 = vst.msk [vmem:[#allocation5 + $0x8] sm:$0xff] %vm33, %v76
    // Predicated region
    $region18: #{tpu_custom_call.1} parent=1 // pred_check
      _
    $region19: #{tpu_custom_call.1} parent=1 // pred_check_branch
      %80 = sbr.rel (0) target = $region21
    $region20: #{tpu_custom_call.1} parent=1 // pred_region
      %s82 = ssub.s32 256, 256
      %83 = vsyncadd [#allocation4], %s82
      %s84 = sshll.u32 [#allocation5], 4
      %s85 = int_to_ptr.vmem [resolvable:$true] %s84
      %90 = dma.vmem_to_hbm [thread:$0]  %s85, 256, %s3, [#allocation4], 128, 128, 8
    $region21: #{tpu_custom_call.1} parent=1 // pred_fallthru
      _
    // Predicated region
    $region22: #{tpu_custom_call.1} parent=1 // pred_check
      _
    $region23: #{tpu_custom_call.1} parent=1 // pred_check_branch
      %92 = sbr.rel (0) target = $region25
    $region24: #{tpu_custom_call.1} parent=1 // pred_region
      %93 = dma.done [#allocation4], 256
    $region25: #{tpu_custom_call.1} parent=1 // pred_fallthru
      _
    %94 = vsyncpa [#allocation3], 1
    %95 = vsyncpa [#allocation4], 1

</llo_original>
